<compile_context>
chip_gen: v7x
topology: tpu7x:2x2x1
jax: 0.10.0
libtpu: 0.0.40
codegen_flags: <defaults>
</compile_context>

<pallas_src>
import jax
import jax.numpy as jnp
from jax import lax
from jax.experimental import pallas as pl
from jax.experimental.pallas import tpu as pltpu


def _round_up(x: int, m: int) -> int:
    return (x + m - 1) // m * m


def vector_attention(q, k, v, w_q, w_k, w_v, output_dim, *,
                     compute_dtype=None, tile_q=256, tile_kv=512):
    """q: (B, d_q), k: (B, d_k), v: (B, d_v); w_*: (output_dim, in_dim) (PyTorch layout)."""
    B, d_q = q.shape
    d_k = k.shape[1]
    d_v = v.shape[1]
    out_dtype = q.dtype
    cdt = compute_dtype or q.dtype
    scale = float(output_dim) ** (-0.5)          # scale uses the ORIGINAL output_dim

    # ---- wrapper-side layout plumbing (tiny arrays) -------------------------
    D_pad = _round_up(output_dim, 128)           # lane-dense projected width

    def pad_w(w):                                # (out, in) -> (in, D_pad), zero cols
        wt = w.T.astype(cdt)
        return jnp.pad(wt, ((0, 0), (0, D_pad - output_dim)))

    wq_t = pad_w(w_q)                            # (d_q, D_pad)
    wk_t = pad_w(w_k)                            # (d_k, D_pad)
    wv_t = pad_w(w_v)                            # (d_v, D_pad)
    # Block-diagonal fused k/v weight: one MXU contraction for both projections.
    wkv_t = jnp.concatenate(
        [jnp.concatenate([wk_t, jnp.zeros((d_k, D_pad), cdt)], axis=1),
         jnp.concatenate([jnp.zeros((d_v, D_pad), cdt), wv_t], axis=1)],
        axis=0)                                  # (d_k + d_v, 2*D_pad)

    TQ = min(tile_q, _round_up(B, 8))
    TK = min(tile_kv, _round_up(B, 8))
    Bq = _round_up(B, TQ)                        # padded query rows (garbage rows sliced)
    Bk = _round_up(B, TK)                        # padded key rows   (masked in softmax)

    q_p = jnp.pad(q.astype(cdt), ((0, Bq - B), (0, 0)))
    kv_p = jnp.pad(jnp.concatenate([k, v], axis=1).astype(cdt),
                   ((0, Bk - B), (0, 0)))        # (Bk, d_k + d_v)

    n_q = Bq // TQ
    n_kv = Bk // TK

    # ---- kernel -------------------------------------------------------------
    def kernel(q_ref, kv_ref, wq_ref, wkv_ref, o_ref,
               qp_ref, m_ref, l_ref, acc_ref):
        ki = pl.program_id(1)

        @pl.when(ki == 0)
        def _():
            m_ref[...] = jnp.full_like(m_ref, -jnp.inf)
            l_ref[...] = jnp.zeros_like(l_ref)
            acc_ref[...] = jnp.zeros_like(acc_ref)
            qp = jnp.dot(q_ref[...], wq_ref[...],
                         preferred_element_type=jnp.float32)
            qp_ref[...] = (qp * scale).astype(qp_ref.dtype)   # fold scale into q_

        # Fused k/v projection: one MXU op -> (TK, 2*D_pad), split at 128-boundary.
        kv_proj = jnp.dot(kv_ref[...], wkv_ref[...],
                          preferred_element_type=jnp.float32)
        k_ = kv_proj[:, :D_pad].astype(cdt)
        v_ = kv_proj[:, D_pad:].astype(cdt)

        # QK^T: contract last dims of both operands (no explicit transpose).
        s = lax.dot_general(qp_ref[...], k_,
                            dimension_numbers=(((1,), (1,)), ((), ())),
                            preferred_element_type=jnp.float32)    # (TQ, TK)

        if B < Bk:  # trace-time constant: mask zero-padded key rows
            col = ki * TK + lax.broadcasted_iota(jnp.int32, s.shape, 1)
            s = jnp.where(col < B, s, -jnp.inf)

        # Online (flash-style) softmax accumulation, all in f32.
        m_prev = m_ref[...]
        m_new = jnp.maximum(m_prev, jnp.max(s, axis=-1, keepdims=True))
        alpha = jnp.exp(m_prev - m_new)
        p = jnp.exp(s - m_new)
        l_ref[...] = alpha * l_ref[...] + jnp.sum(p, axis=-1, keepdims=True)
        acc_ref[...] = alpha * acc_ref[...] + jnp.dot(
            p.astype(cdt), v_, preferred_element_type=jnp.float32)
        m_ref[...] = m_new

        @pl.when(ki == n_kv - 1)
        def _():
            o_ref[...] = (acc_ref[...] *
                          pl.reciprocal(l_ref[...], approx=True)).astype(o_ref.dtype)

    # ---- specs / cost -------------------------------------------------------
    grid_spec = pltpu.PrefetchScalarGridSpec(
        num_scalar_prefetch=0,
        grid=(n_q, n_kv),
        in_specs=[
            pl.BlockSpec((TQ, d_q), lambda qi, ki: (qi, 0)),          # q tile
            pl.BlockSpec((TK, d_k + d_v), lambda qi, ki: (ki, 0)),    # fused k|v tile
            pl.BlockSpec((d_q, D_pad), lambda qi, ki: (0, 0)),        # resident weights
            pl.BlockSpec((d_k + d_v, 2 * D_pad), lambda qi, ki: (0, 0)),
        ],
        out_specs=pl.BlockSpec((TQ, D_pad), lambda qi, ki: (qi, 0)),  # accumulator over ki
        scratch_shapes=[
            pltpu.VMEM((TQ, D_pad), cdt),         # projected, pre-scaled q tile
            pltpu.VMEM((TQ, 1), jnp.float32),     # running max
            pltpu.VMEM((TQ, 1), jnp.float32),     # running denominator
            pltpu.VMEM((TQ, D_pad), jnp.float32), # output accumulator
        ],
    )

    itemsize = jnp.dtype(cdt).itemsize
    flops = (2 * Bq * d_q * D_pad
             + n_q * 2 * Bk * (d_k + d_v) * (2 * D_pad)   # kv proj recomputed per q tile
             + 2 * (2 * Bq * Bk * D_pad))                 # QK^T + PV
    transcendentals = Bq * Bk + Bq * n_kv
    bytes_accessed = int(q_p.size * itemsize
                         + n_q * kv_p.size * itemsize
                         + n_q * n_kv * (wq_t.size + wkv_t.size) * itemsize
                         + Bq * D_pad * jnp.dtype(out_dtype).itemsize)

    out = pl.pallas_call(
        kernel,
        out_shape=jax.ShapeDtypeStruct((Bq, D_pad), out_dtype),
        grid_spec=grid_spec,
        compiler_params=pltpu.CompilerParams(
            dimension_semantics=("parallel", "arbitrary"),
            vmem_limit_bytes=32 * 1024 * 1024),
        cost_estimate=pl.CostEstimate(flops=int(flops),
                                      transcendentals=int(transcendentals),
                                      bytes_accessed=bytes_accessed),
    )(q_p, kv_p, wq_t, wkv_t)

    return out[:B, :output_dim]


def _reference(q, k, v, w_q, w_k, w_v, output_dim):
    scale = float(output_dim) ** (-0.5)
    q_ = q @ w_q.T
    k_ = k @ w_k.T
    v_ = v @ w_v.T
    return jax.nn.softmax((q_ @ k_.T) * scale, axis=-1) @ v_


if __name__ == "__main__":
    key = jax.random.PRNGKey(0)
    q_dim, k_dim, v_dim, output_dim = 16, 24, 32, 64
    keys = jax.random.split(key, 6)

    def init_linear(kk, out_d, in_d):   # mimics nn.Linear weight shape (out, in)
        bound = 1.0 / (in_d ** 0.5)
        return jax.random.uniform(kk, (out_d, in_d), jnp.float32, -bound, bound)

    w_q = init_linear(keys[3], output_dim, q_dim)
    w_k = init_linear(keys[4], output_dim, k_dim)
    w_v = init_linear(keys[5], output_dim, v_dim)

    def run_case(B, compute_dtype, atol, rtol):
        kq, kk_, kv_ = jax.random.split(jax.random.fold_in(key, B), 3)
        q = jax.random.normal(kq, (B, q_dim), jnp.float32)
        k = jax.random.normal(kk_, (B, k_dim), jnp.float32)
        v = jax.random.normal(kv_, (B, v_dim), jnp.float32)
        out = vector_attention(q, k, v, w_q, w_k, w_v, output_dim,
                               compute_dtype=compute_dtype)
        out = jax.block_until_ready(out)
        ref = _reference(q, k, v, w_q, w_k, w_v, output_dim)
        assert out.shape == (B, output_dim)
        err = float(jnp.max(jnp.abs(out - ref)))
        assert jnp.allclose(out, ref, atol=atol, rtol=rtol), (
            f"mismatch B={B} dtype={compute_dtype}: max abs err {err}")
        return out

    run_case(8, None, 2e-3, 2e-3)            # small, single tile, f32 operands
    run_case(300, None, 2e-3, 2e-3)          # multi q-tile + masked padded kv rows
    run_case(8, jnp.bfloat16, 1e-1, 1e-1)    # bf16 MXU operands, f32 accumulation

    print("KERNEL_OK")
</pallas_src>

<mosaic_0001>
module attributes {stable_mosaic.version = 11 : i64} {
  func.func @kernel(%arg0: i32, %arg1: i32, %arg2: memref<8x16xf32, #tpu.memory_space<vmem>>, %arg3: memref<8x56xf32, #tpu.memory_space<vmem>>, %arg4: memref<16x128xf32, #tpu.memory_space<vmem>>, %arg5: memref<56x256xf32, #tpu.memory_space<vmem>>, %arg6: memref<8x128xf32, #tpu.memory_space<vmem>>, %arg7: memref<8x128xf32, #tpu.memory_space<vmem>>, %arg8: memref<8x1xf32, #tpu.memory_space<vmem>>, %arg9: memref<8x1xf32, #tpu.memory_space<vmem>>, %arg10: memref<8x128xf32, #tpu.memory_space<vmem>>) attributes {dimension_semantics = [#tpu.dimension_semantics<parallel>, #tpu.dimension_semantics<arbitrary>], iteration_bounds = array<i64: 1, 1>, scalar_prefetch = 0 : i64, scratch_operands = 4 : i64, tpu.core_type = #tpu.core_type<tc>, window_params = [{transform_indices = @transform_0, window_bounds = array<i64: 8, 16>}, {transform_indices = @transform_1, window_bounds = array<i64: 8, 56>}, {pipeline_mode = #tpu.pipeline_mode<synchronous>, transform_indices = @transform_2, window_bounds = array<i64: 16, 128>}, {pipeline_mode = #tpu.pipeline_mode<synchronous>, transform_indices = @transform_3, window_bounds = array<i64: 56, 256>}, {transform_indices = @transform_4, window_bounds = array<i64: 8, 128>}]} {
    %c0_i32 = arith.constant 0 : i32
    %0 = arith.cmpi eq, %arg1, %c0_i32 : i32
    %1 = arith.extui %0 : i1 to i32
    %c0_i32_0 = arith.constant 0 : i32
    %2 = arith.cmpi ne, %1, %c0_i32_0 : i32
    scf.if %2 {
      %cst_24 = arith.constant 0xFF800000 : f32
      %35 = vector.broadcast %cst_24 : f32 to vector<8x1xf32>
      %c0_25 = arith.constant 0 : index
      %c0_26 = arith.constant 0 : index
      %36 = vector.load %arg8[%c0_25, %c0_26] : memref<8x1xf32, #tpu.memory_space<vmem>>, vector<8x1xf32>
      tpu.vector_store %arg8[%c0_25, %c0_26], %35 {strides = array<i32>} : memref<8x1xf32, #tpu.memory_space<vmem>>, vector<8x1xf32>,
      %cst_27 = arith.constant 0.000000e+00 : f32
      %37 = vector.broadcast %cst_27 : f32 to vector<8x1xf32>
      %c0_28 = arith.constant 0 : index
      %c0_29 = arith.constant 0 : index
      %38 = vector.load %arg9[%c0_28, %c0_29] : memref<8x1xf32, #tpu.memory_space<vmem>>, vector<8x1xf32>
      tpu.vector_store %arg9[%c0_28, %c0_29], %37 {strides = array<i32>} : memref<8x1xf32, #tpu.memory_space<vmem>>, vector<8x1xf32>,
      %cst_30 = arith.constant 0.000000e+00 : f32
      %39 = vector.broadcast %cst_30 : f32 to vector<8x128xf32>
      %c0_31 = arith.constant 0 : index
      %c0_32 = arith.constant 0 : index
      %40 = vector.load %arg10[%c0_31, %c0_32] : memref<8x128xf32, #tpu.memory_space<vmem>>, vector<8x128xf32>
      tpu.vector_store %arg10[%c0_31, %c0_32], %39 {strides = array<i32>} : memref<8x128xf32, #tpu.memory_space<vmem>>, vector<8x128xf32>,
      %c0_33 = arith.constant 0 : index
      %c0_34 = arith.constant 0 : index
      %41 = vector.load %arg2[%c0_33, %c0_34] : memref<8x16xf32, #tpu.memory_space<vmem>>, vector<8x16xf32>
      %c0_35 = arith.constant 0 : index
      %c0_36 = arith.constant 0 : index
      %42 = vector.load %arg4[%c0_35, %c0_36] : memref<16x128xf32, #tpu.memory_space<vmem>>, vector<16x128xf32>
      %cst_37 = arith.constant dense<0.000000e+00> : vector<8x128xf32>
      %43 = tpu.matmul %41, %42, %cst_37 {dimension_numbers = #tpu.dot_dimension_numbers<[1], [0], [0], [1], [0, 0, 1, 1], [], []>} : vector<8x16xf32>, vector<16x128xf32>, vector<8x128xf32> -> vector<8x128xf32>
      %cst_38 = arith.constant 1.250000e-01 : f32
      %44 = vector.broadcast %cst_38 : f32 to vector<8x128xf32>
      %45 = arith.mulf %43, %44 : vector<8x128xf32>
      %c0_39 = arith.constant 0 : index
      %c0_40 = arith.constant 0 : index
      %46 = vector.load %arg7[%c0_39, %c0_40] : memref<8x128xf32, #tpu.memory_space<vmem>>, vector<8x128xf32>
      tpu.vector_store %arg7[%c0_39, %c0_40], %45 {strides = array<i32>} : memref<8x128xf32, #tpu.memory_space<vmem>>, vector<8x128xf32>,
    } else {
    }
    %c0 = arith.constant 0 : index
    %c0_1 = arith.constant 0 : index
    %3 = vector.load %arg3[%c0, %c0_1] : memref<8x56xf32, #tpu.memory_space<vmem>>, vector<8x56xf32>
    %c0_2 = arith.constant 0 : index
    %c0_3 = arith.constant 0 : index
    %4 = vector.load %arg5[%c0_2, %c0_3] : memref<56x256xf32, #tpu.memory_space<vmem>>, vector<56x256xf32>
    %cst = arith.constant dense<0.000000e+00> : vector<8x256xf32>
    %5 = tpu.matmul %3, %4, %cst {dimension_numbers = #tpu.dot_dimension_numbers<[1], [0], [0], [1], [0, 0, 1, 1], [], []>} : vector<8x56xf32>, vector<56x256xf32>, vector<8x256xf32> -> vector<8x256xf32>
    %6 = vector.extract_strided_slice %5 {offsets = [0, 0], sizes = [8, 128], strides = [1, 1]} : vector<8x256xf32> to vector<8x128xf32>
    %7 = vector.extract_strided_slice %5 {offsets = [0, 128], sizes = [8, 128], strides = [1, 1]} : vector<8x256xf32> to vector<8x128xf32>
    %c0_4 = arith.constant 0 : index
    %c0_5 = arith.constant 0 : index
    %8 = vector.load %arg7[%c0_4, %c0_5] : memref<8x128xf32, #tpu.memory_space<vmem>>, vector<8x128xf32>
    %cst_6 = arith.constant dense<0.000000e+00> : vector<8x8xf32>
    %9 = tpu.matmul %8, %6, %cst_6 {dimension_numbers = #tpu.dot_dimension_numbers<[1], [1], [0], [0], [0, 0, 1, 0], [], []>} : vector<8x128xf32>, vector<8x128xf32>, vector<8x8xf32> -> vector<8x8xf32>
    %c0_7 = arith.constant 0 : index
    %c0_8 = arith.constant 0 : index
    %10 = vector.load %arg8[%c0_7, %c0_8] : memref<8x1xf32, #tpu.memory_space<vmem>>, vector<8x1xf32>
    %cst_9 = arith.constant dense<0xFF800000> : vector<8xf32>
    %11 = vector.multi_reduction <maximumf>, %9, %cst_9 [1] : vector<8x8xf32> to vector<8xf32>
    %12 = vector.shape_cast %11 : vector<8xf32> to vector<8x1xf32>
    %13 = arith.maximumf %10, %12 : vector<8x1xf32>
    %14 = arith.subf %10, %13 : vector<8x1xf32>
    %15 = math.exp %14 : vector<8x1xf32>
    %16 = vector.broadcast %13 : vector<8x1xf32> to vector<8x8xf32>
    %17 = arith.subf %9, %16 : vector<8x8xf32>
    %18 = math.exp %17 : vector<8x8xf32>
    %c0_10 = arith.constant 0 : index
    %c0_11 = arith.constant 0 : index
    %19 = vector.load %arg9[%c0_10, %c0_11] : memref<8x1xf32, #tpu.memory_space<vmem>>, vector<8x1xf32>
    %20 = arith.mulf %15, %19 : vector<8x1xf32>
    %cst_12 = arith.constant dense<0.000000e+00> : vector<8xf32>
    %21 = vector.multi_reduction <add>, %18, %cst_12 [1] : vector<8x8xf32> to vector<8xf32>
    %22 = vector.shape_cast %21 : vector<8xf32> to vector<8x1xf32>
    %23 = arith.addf %20, %22 : vector<8x1xf32>
    %c0_13 = arith.constant 0 : index
    %c0_14 = arith.constant 0 : index
    %24 = vector.load %arg9[%c0_13, %c0_14] : memref<8x1xf32, #tpu.memory_space<vmem>>, vector<8x1xf32>
    tpu.vector_store %arg9[%c0_13, %c0_14], %23 {strides = array<i32>} : memref<8x1xf32, #tpu.memory_space<vmem>>, vector<8x1xf32>,
    %c0_15 = arith.constant 0 : index
    %c0_16 = arith.constant 0 : index
    %25 = vector.load %arg10[%c0_15, %c0_16] : memref<8x128xf32, #tpu.memory_space<vmem>>, vector<8x128xf32>
    %26 = vector.broadcast %15 : vector<8x1xf32> to vector<8x128xf32>
    %27 = arith.mulf %26, %25 : vector<8x128xf32>
    %cst_17 = arith.constant dense<0.000000e+00> : vector<8x128xf32>
    %28 = tpu.matmul %18, %7, %cst_17 {dimension_numbers = #tpu.dot_dimension_numbers<[1], [0], [0], [1], [0, 0, 1, 1], [], []>} : vector<8x8xf32>, vector<8x128xf32>, vector<8x128xf32> -> vector<8x128xf32>
    %29 = arith.addf %27, %28 : vector<8x128xf32>
    %c0_18 = arith.constant 0 : index
    %c0_19 = arith.constant 0 : index
    %30 = vector.load %arg10[%c0_18, %c0_19] : memref<8x128xf32, #tpu.memory_space<vmem>>, vector<8x128xf32>
    tpu.vector_store %arg10[%c0_18, %c0_19], %29 {strides = array<i32>} : memref<8x128xf32, #tpu.memory_space<vmem>>, vector<8x128xf32>,
    %c0_20 = arith.constant 0 : index
    %c0_21 = arith.constant 0 : index
    %31 = vector.load %arg8[%c0_20, %c0_21] : memref<8x1xf32, #tpu.memory_space<vmem>>, vector<8x1xf32>
    tpu.vector_store %arg8[%c0_20, %c0_21], %13 {strides = array<i32>} : memref<8x1xf32, #tpu.memory_space<vmem>>, vector<8x1xf32>,
    %c0_i32_22 = arith.constant 0 : i32
    %32 = arith.cmpi eq, %arg1, %c0_i32_22 : i32
    %33 = arith.extui %32 : i1 to i32
    %c0_i32_23 = arith.constant 0 : i32
    %34 = arith.cmpi ne, %33, %c0_i32_23 : i32
    scf.if %34 {
      %c0_24 = arith.constant 0 : index
      %c0_25 = arith.constant 0 : index
      %35 = vector.load %arg10[%c0_24, %c0_25] : memref<8x128xf32, #tpu.memory_space<vmem>>, vector<8x128xf32>
      %c0_26 = arith.constant 0 : index
      %c0_27 = arith.constant 0 : index
      %36 = vector.load %arg9[%c0_26, %c0_27] : memref<8x1xf32, #tpu.memory_space<vmem>>, vector<8x1xf32>
      %37 = tpu.reciprocal %36 {approx = true} : vector<8x1xf32> -> vector<8x1xf32>
      %38 = vector.broadcast %37 : vector<8x1xf32> to vector<8x128xf32>
      %39 = arith.mulf %35, %38 : vector<8x128xf32>
      %c0_28 = arith.constant 0 : index
      %c0_29 = arith.constant 0 : index
      %40 = vector.load %arg6[%c0_28, %c0_29] : memref<8x128xf32, #tpu.memory_space<vmem>>, vector<8x128xf32>
      tpu.vector_store %arg6[%c0_28, %c0_29], %39 {strides = array<i32>} : memref<8x128xf32, #tpu.memory_space<vmem>>, vector<8x128xf32>,
    } else {
    }
    return
  }
  func.func @transform_0(%arg0: i32, %arg1: i32) -> (i32, i32) {
    %c0_i32 = arith.constant 0 : i32
    %c0_i32_0 = arith.constant 0 : i32
    return %arg0, %c0_i32 : i32, i32
  }
  func.func @transform_1(%arg0: i32, %arg1: i32) -> (i32, i32) {
    %c0_i32 = arith.constant 0 : i32
    %c0_i32_0 = arith.constant 0 : i32
    return %arg1, %c0_i32 : i32, i32
  }
  func.func @transform_2(%arg0: i32, %arg1: i32) -> (i32, i32) {
    %c0_i32 = arith.constant 0 : i32
    %c0_i32_0 = arith.constant 0 : i32
    %c0_i32_1 = arith.constant 0 : i32
    return %c0_i32, %c0_i32_0 : i32, i32
  }
  func.func @transform_3(%arg0: i32, %arg1: i32) -> (i32, i32) {
    %c0_i32 = arith.constant 0 : i32
    %c0_i32_0 = arith.constant 0 : i32
    %c0_i32_1 = arith.constant 0 : i32
    return %c0_i32, %c0_i32_0 : i32, i32
  }
  func.func @transform_4(%arg0: i32, %arg1: i32) -> (i32, i32) {
    %c0_i32 = arith.constant 0 : i32
    %c0_i32_0 = arith.constant 0 : i32
    return %arg0, %c0_i32 : i32, i32
  }
}

</mosaic_0001>

<llo_original>
// kernel: tpu_custom_call.1
$region0: #{tpu_custom_call.1}
  #allocation0 [shape = 'u32[]', space=smem, size = 0x4, offset = 0x4, fixed_abs, tag = 'smem constant byte address 0x4 - core index']
  #allocation1 [shape = 'u32[144,128]{1,0:T(1,128)}', space=vmem, size = 0x12000, scoped, tag = 'internal scratch']
  #allocation2 [shape = 'f32[8,128]{1,0:T(8,128)}', space=vmem, size = 0x1000, scoped, tag = 'scratch operand']
  #allocation3 [shape = 'f32[8,1]{1,0:T(8,128)}', space=vmem, size = 0x1000, scoped, tag = 'scratch operand']
  #allocation4 [shape = 'f32[8,1]{1,0:T(8,128)}', space=vmem, size = 0x1000, scoped, tag = 'scratch operand']
  #allocation5 [shape = 'f32[8,128]{1,0:T(8,128)}', space=vmem, size = 0x1000, scoped, tag = 'scratch operand']
  %s0 = inlined_call_operand.hbm [shape: f32[8,16], index: 0, kind: input, shape index: {}]
  %s1 = inlined_call_operand.hbm [shape: f32[8,56], index: 1, kind: input, shape index: {}]
  %s2 = inlined_call_operand.hbm [shape: f32[16,128], index: 2, kind: input, shape index: {}]
  %s3 = inlined_call_operand.hbm [shape: f32[56,256], index: 3, kind: input, shape index: {}]
  %s4 = inlined_call_operand.hbm [shape: f32[8,128], index: 4, kind: output, shape index: {}]
  %s5 = sld [smem:[#allocation0]]
  $region50: #{tpu_custom_call.1} parent=0
    _
  %s7 = ssub.s32 1, %s5
  %s8 = scalar_select 0, %s7, %s5
  $region1: #{tpu_custom_call.1} parent=0
    #allocation6 [shape = 'u8[4096]{0}', space=vmem, size = 0x1000, scoped, tag = 'input window, operand 0, single buffered']
    #allocation7 [shape = 's32[1]{0}', space=sflag, size = 0x4, scoped, tag = 'scoped memory for tpu_custom_call.1']
    #allocation8 [shape = 's32[1]{0}', space=sflag, size = 0x4, scoped, tag = 'scoped memory for tpu_custom_call.1']
    #allocation9 [shape = 'u8[4096]{0}', space=vmem, size = 0x1000, scoped, tag = 'input window, operand 1, single buffered']
    #allocation10 [shape = 's32[1]{0}', space=sflag, size = 0x4, scoped, tag = 'scoped memory for tpu_custom_call.1']
    #allocation11 [shape = 'u8[8192]{0}', space=vmem, size = 0x2000, scoped, tag = 'input window, operand 2, single buffered']
    #allocation12 [shape = 'u8[57344]{0}', space=vmem, size = 0xe000, scoped, tag = 'input window, operand 3, single buffered']
    #allocation13 [shape = 's32[1]{0}', space=sflag, size = 0x4, scoped, tag = 'scoped memory for tpu_custom_call.1']
    #allocation14 [shape = 'u8[4096]{0}', space=vmem, size = 0x1000, scoped, tag = 'output window, operand 0, single buffered']
    %9 = vsyncpa [#allocation7], 0
    %10 = vsyncpa [#allocation10], 0
    %11 = vsyncpa [#allocation13], 0
    %12 = vsyncpa [#allocation8], 0
    // Predicated region
    $region2: #{tpu_custom_call.1} parent=1 // pred_check
      _
    $region3: #{tpu_custom_call.1} parent=1 // pred_check_branch
      %14 = sbr.rel (0) target = $region5
    $region4: #{tpu_custom_call.1} parent=1 // pred_region
      %s16 = ssub.s32 128, 128
      %17 = vsyncadd [#allocation7], %s16
      %s19 = sshll.u32 [#allocation6], 4
      %s20 = int_to_ptr.vmem [resolvable:$true] %s19
      %22 = dma.hbm_to_vmem [thread:$0]  %s0, 128, %s20, [#allocation7]
    $region5: #{tpu_custom_call.1} parent=1 // pred_fallthru
      _
    // Predicated region
    $region6: #{tpu_custom_call.1} parent=1 // pred_check
      _
    $region7: #{tpu_custom_call.1} parent=1 // pred_check_branch
      %24 = sbr.rel (0) target = $region9
    $region8: #{tpu_custom_call.1} parent=1 // pred_region
      %s26 = ssub.s32 128, 128
      %27 = vsyncadd [#allocation10], %s26
      %s29 = sshll.u32 [#allocation9], 4
      %s30 = int_to_ptr.vmem [resolvable:$true] %s29
      %32 = dma.hbm_to_vmem [thread:$0]  %s1, 128, %s30, [#allocation10]
    $region9: #{tpu_custom_call.1} parent=1 // pred_fallthru
      _
    // Predicated region
    $region10: #{tpu_custom_call.1} parent=1 // pred_check
      _
    $region11: #{tpu_custom_call.1} parent=1 // pred_check_branch
      %34 = sbr.rel (0) target = $region13
    $region12: #{tpu_custom_call.1} parent=1 // pred_region
      %s36 = ssub.s32 256, 256
      %37 = vsyncadd [#allocation10], %s36
      %s38 = sshll.u32 [#allocation11], 4
      %s39 = int_to_ptr.vmem [resolvable:$true] %s38
      %44 = dma.hbm_to_vmem [thread:$0]  %s2, 256, %s39, [#allocation10], 128, 128, 8
    $region13: #{tpu_custom_call.1} parent=1 // pred_fallthru
      _
    // Predicated region
    $region14: #{tpu_custom_call.1} parent=1 // pred_check
      _
    $region15: #{tpu_custom_call.1} parent=1 // pred_check_branch
      %46 = sbr.rel (0) target = $region17
    $region16: #{tpu_custom_call.1} parent=1 // pred_region
      %s48 = ssub.s32 1792, 1792
      %49 = vsyncadd [#allocation13], %s48
      %s50 = sshll.u32 [#allocation12], 4
      %s51 = int_to_ptr.vmem [resolvable:$true] %s50
      %56 = dma.hbm_to_vmem [thread:$0]  %s3, 1792, %s51, [#allocation13], 256, 256, 16
    $region17: #{tpu_custom_call.1} parent=1 // pred_fallthru
      _
    // Predicated region
    $region18: #{tpu_custom_call.1} parent=1 // pred_check
      _
    $region19: #{tpu_custom_call.1} parent=1 // pred_check_branch
      %58 = sbr.rel (0) target = $region21
    $region20: #{tpu_custom_call.1} parent=1 // pred_region
      %59 = dma.done [#allocation7], 128
    $region21: #{tpu_custom_call.1} parent=1 // pred_fallthru
      _
    // Predicated region
    $region22: #{tpu_custom_call.1} parent=1 // pred_check
      _
    $region23: #{tpu_custom_call.1} parent=1 // pred_check_branch
      %61 = sbr.rel (0) target = $region25
    $region24: #{tpu_custom_call.1} parent=1 // pred_region
      %62 = dma.done [#allocation10], 128
    $region25: #{tpu_custom_call.1} parent=1 // pred_fallthru
      _
    // Predicated region
    $region26: #{tpu_custom_call.1} parent=1 // pred_check
      _
    $region27: #{tpu_custom_call.1} parent=1 // pred_check_branch
      %64 = sbr.rel (0) target = $region29
    $region28: #{tpu_custom_call.1} parent=1 // pred_region
      %65 = dma.done [#allocation10], 256
    $region29: #{tpu_custom_call.1} parent=1 // pred_fallthru
      _
    // Predicated region
    $region30: #{tpu_custom_call.1} parent=1 // pred_check
      _
    $region31: #{tpu_custom_call.1} parent=1 // pred_check_branch
      %67 = sbr.rel (0) target = $region33
    $region32: #{tpu_custom_call.1} parent=1 // pred_region
      %68 = dma.done [#allocation13], 1792
    $region33: #{tpu_custom_call.1} parent=1 // pred_fallthru
      _
    %p69 = scmp.eq.s32.totalorder 0, 0
    // Predicated region
    $region34: #{tpu_custom_call.1} parent=1 // pred_check
      %p70 = pneg %p69
    $region35: #{tpu_custom_call.1} parent=1 // pred_check_branch
      %72 = sbr.rel (%p70) target = $region37
    $region36: #{tpu_custom_call.1} parent=1 // pred_region
      %vm73 = vcmask 7168
      %74 = vst.msk [vmem:[#allocation3] sm:$0xff] %vm73, -inf
      %75 = vst.msk [vmem:[#allocation4] sm:$0xff] %vm73, 0.0
      %76 = vst [vmem:[#allocation5] sm:$0xff] 0.0
      %v77 = vld [vmem:[#allocation6] sm:$0xff]
      %v78 = vld [vmem:[#allocation11] sm:$0xff]
      %v79 = vld [vmem:[#allocation11 + $0x8] sm:$0xff]
      %vm80 = vcmask 130048
      %v82 = vsel %vm80, %v77, 0
      %84 = vmatprep.subr.mxu0 0.0
      %85 = vmatpush1.msra.mxu0 %v78
      %86 = vmatprep.subr.mxu0 0.0
      %87 = vmatpush1.msra.mxu0 %v79
      %88 = vmatprep.subr.mxu0 0.0
      %89 = vmatpush1.msra.mxu0 0.0
      %90 = vmatprep.subr.mxu0 0.0
      %91 = vmatpush1.msra.mxu0 0.0
      %92 = vmatprep.subr.mxu0 0.0
      %93 = vmatpush1.msra.mxu0 0.0
      %94 = vmatprep.subr.mxu0 0.0
      %95 = vmatpush1.msra.mxu0 0.0
      %96 = vmatprep.subr.mxu0 0.0
      %97 = vmatpush1.msra.mxu0 0.0
      %98 = vmatprep.subr.mxu0 0.0
      %99 = vmatpush1.msra.mxu0 0.0
      %100 = vmatprep.subr.mxu0 0.0
      %101 = vmatpush1.msra.mxu0 0.0
      %102 = vmatprep.subr.mxu0 0.0
      %103 = vmatpush1.msra.mxu0 0.0
      %104 = vmatprep.subr.mxu0 0.0
      %105 = vmatpush1.msra.mxu0 0.0
      %106 = vmatprep.subr.mxu0 0.0
      %107 = vmatpush1.msra.mxu0 0.0
      %108 = vmatprep.subr.mxu0 0.0
      %109 = vmatpush1.msra.mxu0 0.0
      %110 = vmatprep.subr.mxu0 0.0
      %111 = vmatpush1.msra.mxu0 0.0
      %112 = vmatprep.subr.mxu0 0.0
      %113 = vmatpush1.msra.mxu0 0.0
      %114 = vmatprep.subr.mxu0 0.0
      %115 = vmatpush1.msra.mxu0 0.0
      %116 = vmatprep.subr.mxu0 0.0
      %117 = vmatpush1.msra.mxu0 0.0
      %118 = vmatprep.subr.mxu0 0.0
      %119 = vmatpush1.msra.mxu0 0.0
      %120 = vmatprep.subr.mxu0 0.0
      %121 = vmatpush1.msra.mxu0 0.0
      %122 = vmatprep.subr.mxu0 0.0
      %123 = vmatpush1.msra.mxu0 0.0
      %124 = vmatprep.subr.mxu0 0.0
      %125 = vmatpush1.msra.mxu0 0.0
      %126 = vmatprep.subr.mxu0 0.0
      %127 = vmatpush1.msra.mxu0 0.0
      %128 = vmatprep.subr.mxu0 0.0
      %129 = vmatpush1.msra.mxu0 0.0
      %130 = vmatprep.subr.mxu0 0.0
      %131 = vmatpush1.msra.mxu0 0.0
      %132 = vmatprep.subr.mxu0 0.0
      %133 = vmatpush1.msra.mxu0 0.0
      %134 = vmatprep.subr.mxu0 0.0
      %135 = vmatpush1.msra.mxu0 0.0
      %136 = vmatprep.subr.mxu0 0.0
      %137 = vmatpush1.msra.mxu0 0.0
      %138 = vmatprep.subr.mxu0 0.0
      %139 = vmatpush1.msra.mxu0 0.0
      %140 = vmatprep.subr.mxu0 0.0
      %141 = vmatpush1.msra.mxu0 0.0
      %142 = vmatprep.subr.mxu0 0.0
      %143 = vmatpush1.msra.mxu0 0.0
      %144 = vmatprep.subr.mxu0 0.0
      %145 = vmatpush1.msra.mxu0 0.0
      %146 = vmatprep.subr.mxu0 0.0
      %147 = vmatpush1.msra.mxu0 0.0
      %148 = vmatprep.mubr.f32.mxu0 0.0
      %149 = vmatmul.mubr.f32.gmra.mrb[0].mxu0 %v82
      %v150 = vpop.f32.mrb[0].mxu0
      %v151 = vadd.f32 0.0, %v150
      %v152 = vpop.f32.mrb[0].mxu0
      %153 = vdwg.mxu0
      %v154 = vmul.f32 %v151, 0.125
      %155 = vst [vmem:[#allocation2] sm:$0xff] %v154
    $region37: #{tpu_custom_call.1} parent=1 // pred_fallthru
      _
    %v156 = vld [vmem:[#allocation9] sm:$0xff]
    %v157 = vld [vmem:[#allocation12] sm:$0xff]
    %v158 = vld [vmem:[#allocation12 + $0x8] sm:$0xff]
    %v159 = vld [vmem:[#allocation12 + $0x10] sm:$0xff]
    %v160 = vld [vmem:[#allocation12 + $0x18] sm:$0xff]
    %v161 = vld [vmem:[#allocation12 + $0x20] sm:$0xff]
    %v162 = vld [vmem:[#allocation12 + $0x28] sm:$0xff]
    %v163 = vld [vmem:[#allocation12 + $0x30] sm:$0xff]
    %v164 = vld [vmem:[#allocation12 + $0x38] sm:$0xff]
    %v165 = vld [vmem:[#allocation12 + $0x40] sm:$0xff]
    %v166 = vld [vmem:[#allocation12 + $0x48] sm:$0xff]
    %v167 = vld [vmem:[#allocation12 + $0x50] sm:$0xff]
    %v168 = vld [vmem:[#allocation12 + $0x58] sm:$0xff]
    %v169 = vld [vmem:[#allocation12 + $0x60] sm:$0xff]
    %v170 = vld [vmem:[#allocation12 + $0x68] sm:$0xff]
    %vm171 = vcmask 457728
    %v173 = vsel %vm171, %v156, 0
    %175 = vmatprep.subr.mxu0 %v158
    %176 = vmatpush1.msra.mxu0 %v157
    %177 = vmatprep.subr.mxu0 %v160
    %178 = vmatpush1.msra.mxu0 %v159
    %179 = vmatprep.subr.mxu0 %v162
    %180 = vmatpush1.msra.mxu0 %v161
    %181 = vmatprep.subr.mxu0 %v164
    %182 = vmatpush1.msra.mxu0 %v163
    %183 = vmatprep.subr.mxu0 %v166
    %184 = vmatpush1.msra.mxu0 %v165
    %185 = vmatprep.subr.mxu0 %v168
    %186 = vmatpush1.msra.mxu0 %v167
    %187 = vmatprep.subr.mxu0 %v170
    %188 = vmatpush1.msra.mxu0 %v169
    %189 = vmatprep.subr.mxu0 0.0
    %190 = vmatpush1.msra.mxu0 0.0
    %191 = vmatprep.subr.mxu0 0.0
    %192 = vmatpush1.msra.mxu0 0.0
    %193 = vmatprep.subr.mxu0 0.0
    %194 = vmatpush1.msra.mxu0 0.0
    %195 = vmatprep.subr.mxu0 0.0
    %196 = vmatpush1.msra.mxu0 0.0
    %197 = vmatprep.subr.mxu0 0.0
    %198 = vmatpush1.msra.mxu0 0.0
    %199 = vmatprep.subr.mxu0 0.0
    %200 = vmatpush1.msra.mxu0 0.0
    %201 = vmatprep.subr.mxu0 0.0
    %202 = vmatpush1.msra.mxu0 0.0
    %203 = vmatprep.subr.mxu0 0.0
    %204 = vmatpush1.msra.mxu0 0.0
    %205 = vmatprep.subr.mxu0 0.0
    %206 = vmatpush1.msra.mxu0 0.0
    %207 = vmatprep.subr.mxu0 0.0
    %208 = vmatpush1.msra.mxu0 0.0
    %209 = vmatprep.subr.mxu0 0.0
    %210 = vmatpush1.msra.mxu0 0.0
    %211 = vmatprep.subr.mxu0 0.0
    %212 = vmatpush1.msra.mxu0 0.0
    %213 = vmatprep.subr.mxu0 0.0
    %214 = vmatpush1.msra.mxu0 0.0
    %215 = vmatprep.subr.mxu0 0.0
    %216 = vmatpush1.msra.mxu0 0.0
    %217 = vmatprep.subr.mxu0 0.0
    %218 = vmatpush1.msra.mxu0 0.0
    %219 = vmatprep.subr.mxu0 0.0
    %220 = vmatpush1.msra.mxu0 0.0
    %221 = vmatprep.subr.mxu0 0.0
    %222 = vmatpush1.msra.mxu0 0.0
    %223 = vmatprep.subr.mxu0 0.0
    %224 = vmatpush1.msra.mxu0 0.0
    %225 = vmatprep.subr.mxu0 0.0
    %226 = vmatpush1.msra.mxu0 0.0
    %227 = vmatprep.subr.mxu0 0.0
    %228 = vmatpush1.msra.mxu0 0.0
    %229 = vmatprep.subr.mxu0 0.0
    %230 = vmatpush1.msra.mxu0 0.0
    %231 = vmatprep.subr.mxu0 0.0
    %232 = vmatpush1.msra.mxu0 0.0
    %233 = vmatprep.subr.mxu0 0.0
    %234 = vmatpush1.msra.mxu0 0.0
    %235 = vmatprep.subr.mxu0 0.0
    %236 = vmatpush1.msra.mxu0 0.0
    %237 = vmatprep.subr.mxu0 0.0
    %238 = vmatpush1.msra.mxu0 0.0
    %239 = vmatprep.mubr.f32.mxu0 0.0
    %240 = vmatmul.mubr.f32.gmra.mrb[0].mxu0 %v173
    %v241 = vpop.f32.mrb[0].mxu0
    %v242 = vadd.f32 0.0, %v241
    %v243 = vpop.f32.mrb[0].mxu0
    %v244 = vadd.f32 0.0, %v243
    %245 = vdwg.mxu0
    %v246 = vld [vmem:[#allocation2] sm:$0xff]
    %247 = vmatprep.subr.mxu0 0.0
    %248 = vmatpush1.xpose.msra.mxu0 %v242
    %249 = vmatprep.subr.mxu0 0.0
    %250 = vmatpush1.xpose.msra.mxu0 0.0
    %251 = vmatprep.subr.mxu0 0.0
    %252 = vmatpush1.xpose.msra.mxu0 0.0
    %253 = vmatprep.subr.mxu0 0.0
    %254 = vmatpush1.xpose.msra.mxu0 0.0
    %255 = vmatprep.subr.mxu0 0.0
    %256 = vmatpush1.xpose.msra.mxu0 0.0
    %257 = vmatprep.subr.mxu0 0.0
    %258 = vmatpush1.xpose.msra.mxu0 0.0
    %259 = vmatprep.subr.mxu0 0.0
    %260 = vmatpush1.xpose.msra.mxu0 0.0
    %261 = vmatprep.subr.mxu0 0.0
    %262 = vmatpush1.xpose.msra.mxu0 0.0
    %263 = vmatprep.subr.mxu0 0.0
    %264 = vmatpush1.xpose.msra.mxu0 0.0
    %265 = vmatprep.subr.mxu0 0.0
    %266 = vmatpush1.xpose.msra.mxu0 0.0
    %267 = vmatprep.subr.mxu0 0.0
    %268 = vmatpush1.xpose.msra.mxu0 0.0
    %269 = vmatprep.subr.mxu0 0.0
    %270 = vmatpush1.xpose.msra.mxu0 0.0
    %271 = vmatprep.subr.mxu0 0.0
    %272 = vmatpush1.xpose.msra.mxu0 0.0
    %273 = vmatprep.subr.mxu0 0.0
    %274 = vmatpush1.xpose.msra.mxu0 0.0
    %275 = vmatprep.subr.mxu0 0.0
    %276 = vmatpush1.xpose.msra.mxu0 0.0
    %277 = vmatprep.subr.mxu0 0.0
    %278 = vmatpush1.xpose.msra.mxu0 0.0
    %279 = vmatprep.subr.mxu0 0.0
    %280 = vmatpush1.xpose.msra.mxu0 0.0
    %281 = vmatprep.subr.mxu0 0.0
    %282 = vmatpush1.xpose.msra.mxu0 0.0
    %283 = vmatprep.subr.mxu0 0.0
    %284 = vmatpush1.xpose.msra.mxu0 0.0
    %285 = vmatprep.subr.mxu0 0.0
    %286 = vmatpush1.xpose.msra.mxu0 0.0
    %287 = vmatprep.subr.mxu0 0.0
    %288 = vmatpush1.xpose.msra.mxu0 0.0
    %289 = vmatprep.subr.mxu0 0.0
    %290 = vmatpush1.xpose.msra.mxu0 0.0
    %291 = vmatprep.subr.mxu0 0.0
    %292 = vmatpush1.xpose.msra.mxu0 0.0
    %293 = vmatprep.subr.mxu0 0.0
    %294 = vmatpush1.xpose.msra.mxu0 0.0
    %295 = vmatprep.subr.mxu0 0.0
    %296 = vmatpush1.xpose.msra.mxu0 0.0
    %297 = vmatprep.subr.mxu0 0.0
    %298 = vmatpush1.xpose.msra.mxu0 0.0
    %299 = vmatprep.subr.mxu0 0.0
    %300 = vmatpush1.xpose.msra.mxu0 0.0
    %301 = vmatprep.subr.mxu0 0.0
    %302 = vmatpush1.xpose.msra.mxu0 0.0
    %303 = vmatprep.subr.mxu0 0.0
    %304 = vmatpush1.xpose.msra.mxu0 0.0
    %305 = vmatprep.subr.mxu0 0.0
    %306 = vmatpush1.xpose.msra.mxu0 0.0
    %307 = vmatprep.subr.mxu0 0.0
    %308 = vmatpush1.xpose.msra.mxu0 0.0
    %309 = vmatprep.subr.mxu0 0.0
    %310 = vmatpush1.xpose.msra.mxu0 0.0
    %311 = vmatprep.mubr.f32.mxu0 0.0
    %312 = vmatmul.mubr.f32.gmra.mrb[0].mxu0 %v246
    %v313 = vpop.f32.mrb[0].mxu0
    %v314 = vadd.f32 0.0, %v313
    %v315 = vpop.f32.mrb[0].mxu0
    %316 = vdwg.mxu0
    %v317 = vld [vmem:[#allocation3] sm:$0xff]
    %vm318 = vcmask 64512
    %v319 = vsel %vm318, %v314, -inf
    %320 = vmax.xlane.f32.xlu0 %v319
    %v321 = vpop.xlane.xlu0 %320
    %v322 = vmax.f32 %v317, %v321
    %v323 = vsub.f32 %v317, %v322
    %v324 = vmul.f32 %v323, 1.442695
    %v325 = vpow.pop %v324
    %327 = vset.pattern.permute.xlu0 0
    %328 = vperm.xlu0 %327, %v322
    %v329 = vpop.permute.xlu0 %328
    %v331 = vsub.f32 %v314, %v329
    %v332 = vmul.f32 %v331, 1.442695
    %v333 = vpow.pop %v332
    %v334 = vld [vmem:[#allocation4] sm:$0xff]
    %v335 = vmul.f32 %v325, %v334
    %v336 = vsel %vm318, %v333, 0.0
    %337 = vadd.xlane.f32.xlu0 %v336
    %v338 = vpop.xlane.xlu0 %337
    %v339 = vadd.f32 %v335, %v338
    %vm340 = vcmask 7168
    %341 = vst.msk [vmem:[#allocation4] sm:$0xff] %vm340, %v339
    %v342 = vld [vmem:[#allocation5] sm:$0xff]
    %344 = vset.pattern.permute.xlu0 0
    %345 = vperm.xlu0 %344, %v325
    %v346 = vpop.permute.xlu0 %345
    %v348 = vmul.f32 %v346, %v342
    %v350 = vsel %vm318, %v333, 0
    %352 = vmatprep.subr.mxu0 0.0
    %353 = vmatpush1.msra.mxu0 %v244
    %354 = vmatprep.subr.mxu0 0.0
    %355 = vmatpush1.msra.mxu0 0.0
    %356 = vmatprep.subr.mxu0 0.0
    %357 = vmatpush1.msra.mxu0 0.0
    %358 = vmatprep.subr.mxu0 0.0
    %359 = vmatpush1.msra.mxu0 0.0
    %360 = vmatprep.subr.mxu0 0.0
    %361 = vmatpush1.msra.mxu0 0.0
    %362 = vmatprep.subr.mxu0 0.0
    %363 = vmatpush1.msra.mxu0 0.0
    %364 = vmatprep.subr.mxu0 0.0
    %365 = vmatpush1.msra.mxu0 0.0
    %366 = vmatprep.subr.mxu0 0.0
    %367 = vmatpush1.msra.mxu0 0.0
    %368 = vmatprep.subr.mxu0 0.0
    %369 = vmatpush1.msra.mxu0 0.0
    %370 = vmatprep.subr.mxu0 0.0
    %371 = vmatpush1.msra.mxu0 0.0
    %372 = vmatprep.subr.mxu0 0.0
    %373 = vmatpush1.msra.mxu0 0.0
    %374 = vmatprep.subr.mxu0 0.0
    %375 = vmatpush1.msra.mxu0 0.0
    %376 = vmatprep.subr.mxu0 0.0
    %377 = vmatpush1.msra.mxu0 0.0
    %378 = vmatprep.subr.mxu0 0.0
    %379 = vmatpush1.msra.mxu0 0.0
    %380 = vmatprep.subr.mxu0 0.0
    %381 = vmatpush1.msra.mxu0 0.0
    %382 = vmatprep.subr.mxu0 0.0
    %383 = vmatpush1.msra.mxu0 0.0
    %384 = vmatprep.subr.mxu0 0.0
    %385 = vmatpush1.msra.mxu0 0.0
    %386 = vmatprep.subr.mxu0 0.0
    %387 = vmatpush1.msra.mxu0 0.0
    %388 = vmatprep.subr.mxu0 0.0
    %389 = vmatpush1.msra.mxu0 0.0
    %390 = vmatprep.subr.mxu0 0.0
    %391 = vmatpush1.msra.mxu0 0.0
    %392 = vmatprep.subr.mxu0 0.0
    %393 = vmatpush1.msra.mxu0 0.0
    %394 = vmatprep.subr.mxu0 0.0
    %395 = vmatpush1.msra.mxu0 0.0
    %396 = vmatprep.subr.mxu0 0.0
    %397 = vmatpush1.msra.mxu0 0.0
    %398 = vmatprep.subr.mxu0 0.0
    %399 = vmatpush1.msra.mxu0 0.0
    %400 = vmatprep.subr.mxu0 0.0
    %401 = vmatpush1.msra.mxu0 0.0
    %402 = vmatprep.subr.mxu0 0.0
    %403 = vmatpush1.msra.mxu0 0.0
    %404 = vmatprep.subr.mxu0 0.0
    %405 = vmatpush1.msra.mxu0 0.0
    %406 = vmatprep.subr.mxu0 0.0
    %407 = vmatpush1.msra.mxu0 0.0
    %408 = vmatprep.subr.mxu0 0.0
    %409 = vmatpush1.msra.mxu0 0.0
    %410 = vmatprep.subr.mxu0 0.0
    %411 = vmatpush1.msra.mxu0 0.0
    %412 = vmatprep.subr.mxu0 0.0
    %413 = vmatpush1.msra.mxu0 0.0
    %414 = vmatprep.subr.mxu0 0.0
    %415 = vmatpush1.msra.mxu0 0.0
    %416 = vmatprep.mubr.f32.mxu0 0.0
    %417 = vmatmul.mubr.f32.gmra.mrb[0].mxu0 %v350
    %v418 = vpop.f32.mrb[0].mxu0
    %v419 = vadd.f32 0.0, %v418
    %v420 = vpop.f32.mrb[0].mxu0
    %421 = vdwg.mxu0
    %v422 = vadd.f32 %v348, %v419
    %423 = vst [vmem:[#allocation5] sm:$0xff] %v422
    %424 = vst.msk [vmem:[#allocation3] sm:$0xff] %vm340, %v322
    // Predicated region
    $region38: #{tpu_custom_call.1} parent=1 // pred_check
      %p425 = pneg %p69
    $region39: #{tpu_custom_call.1} parent=1 // pred_check_branch
      %427 = sbr.rel (%p425) target = $region41
    $region40: #{tpu_custom_call.1} parent=1 // pred_region
      %v428 = vld [vmem:[#allocation5] sm:$0xff]
      %v429 = vld [vmem:[#allocation4] sm:$0xff]
      %v430 = vrcp.pop %v429
      %432 = vset.pattern.permute.xlu0 0
      %433 = vperm.xlu0 %432, %v430
      %v434 = vpop.permute.xlu0 %433
      %v436 = vmul.f32 %v428, %v434
      %437 = vst [vmem:[#allocation14] sm:$0xff] %v436
    $region41: #{tpu_custom_call.1} parent=1 // pred_fallthru
      _
    // Predicated region
    $region42: #{tpu_custom_call.1} parent=1 // pred_check
      _
    $region43: #{tpu_custom_call.1} parent=1 // pred_check_branch
      %439 = sbr.rel (0) target = $region45
    $region44: #{tpu_custom_call.1} parent=1 // pred_region
      %s441 = ssub.s32 128, 128
      %442 = vsyncadd [#allocation8], %s441
      %s444 = sshll.u32 [#allocation14], 4
      %s445 = int_to_ptr.vmem [resolvable:$true] %s444
      %447 = dma.vmem_to_hbm [thread:$0]  %s445, 128, %s4, [#allocation8]
    $region45: #{tpu_custom_call.1} parent=1 // pred_fallthru
      _
    // Predicated region
    $region46: #{tpu_custom_call.1} parent=1 // pred_check
      _
    $region47: #{tpu_custom_call.1} parent=1 // pred_check_branch
      %449 = sbr.rel (0) target = $region49
    $region48: #{tpu_custom_call.1} parent=1 // pred_region
      %450 = dma.done [#allocation8], 128
    $region49: #{tpu_custom_call.1} parent=1 // pred_fallthru
      _
    %451 = vsyncpa [#allocation7], 1
    %452 = vsyncpa [#allocation10], 1
    %453 = vsyncpa [#allocation13], 1
    %454 = vsyncpa [#allocation8], 1

</llo_original>
